<compile_context>
chip_gen: v7x
topology: tpu7x:2x2x1
jax: 0.10.0
libtpu: 0.0.40
codegen_flags: <defaults>
</compile_context>

<pallas_src>
import jax
import jax.numpy as jnp
from jax.experimental import pallas as pl
from jax.experimental.pallas import tpu as pltpu

hidden_size = 10
output_size = 5


def _decoder_rnn_kernel(x_ref, h0_ref, w_ref, b_ref, out_ref, hT_ref, hs_ref):
    """Single-invocation kernel; everything VMEM-resident.

    x_ref  : (T*B, H) time-major input
    h0_ref : (B, H)   initial hidden state
    w_ref  : (H, 2H+O) packed [w_ih^T | w_hh^T | w_fc^T]
    b_ref  : (1, H+O)  packed [b_ih+b_hh | b_fc]
    out_ref: (T*B, O) time-major FC output
    hT_ref : (B, H)   final hidden state
    hs_ref : (T*B, H) f32 scratch holding every step's hidden state
    """
    TB, H = x_ref.shape
    B = h0_ref.shape[0]
    T = TB // B
    O = out_ref.shape[1]

    # Carve the packed parameter slab with static windows (prologue, off critical path).
    wih_t = w_ref[:, pl.ds(0, H)]            # (H, H)
    whh_t = w_ref[:, pl.ds(H, H)]            # (H, H)
    wfc_t = w_ref[:, pl.ds(2 * H, O)]        # (H, O)
    b_rnn = b_ref[:, pl.ds(0, H)]            # (1, H)
    b_fc = b_ref[:, pl.ds(H, O)]             # (1, O)

    # Input projection for every time step in one MXU pass (off the serial path).
    xproj = jnp.dot(x_ref[...], wih_t,
                    preferred_element_type=jnp.float32) + b_rnn    # (T*B, H)

    # Serial recurrence: only h @ W_hh^T + tanh per step.  Fully unrolled, static
    # contiguous sublane slices; hidden states go straight into VMEM scratch
    # (no Python-list accumulation / jnp.stack relayout).
    h = h0_ref[...].astype(jnp.float32)                            # (B, H)
    for t in range(T):
        h = jnp.tanh(xproj[t * B:(t + 1) * B, :] +
                     jnp.dot(h, whh_t, preferred_element_type=jnp.float32))
        hs_ref[pl.ds(t * B, B), :] = h

    # Final hidden state: plain 2-D store.
    hT_ref[...] = h.astype(hT_ref.dtype)

    # Batched FC over all steps: one (T*B, H) x (H, O) matmul, one dense 2-D store.
    out = jnp.dot(hs_ref[...], wfc_t, preferred_element_type=jnp.float32) + b_fc
    out_ref[...] = out.astype(out_ref.dtype)


def pack_decoder_params(p):
    """One-time packing of the five tiny parameter tensors into two VMEM slabs.

    Call once at init (NOT per forward): removes the per-call .T / bias-add ops
    and cuts parameter DMAs from 5 to 2.
    """
    H = p["w_ih"].shape[0]
    O = p["w_fc"].shape[0]
    w_pack = jnp.concatenate(
        [p["w_ih"].T.astype(jnp.float32),
         p["w_hh"].T.astype(jnp.float32),
         p["w_fc"].T.astype(jnp.float32)], axis=1)                  # (H, 2H+O)
    b_pack = jnp.concatenate(
        [(p["b_ih"] + p["b_hh"]).astype(jnp.float32),
         p["b_fc"].astype(jnp.float32)]).reshape(1, H + O)          # (1, H+O)
    return {"w_pack": w_pack, "b_pack": b_pack}


def decoder_rnn_forward(x, hidden, packed):
    """x: (B, T, H) float32 batch-first, hidden: (1, B, H) float32.

    Returns (out (B, T, O), hidden (1, B, H)), matching the PyTorch module.
    """
    B, T, H = x.shape
    w_pack = packed["w_pack"]                  # (H, 2H+O)
    b_pack = packed["b_pack"]                  # (1, H+O)
    O = w_pack.shape[1] - 2 * H

    # Tiny time-major 2-D view of x (one XLA transpose-copy of a few hundred bytes).
    # Keeps the kernel itself free of any Mosaic relayouts.
    x_tm = jnp.swapaxes(x, 0, 1).reshape(T * B, H)
    h0 = hidden[0]                             # (B, H)

    vmem = pl.BlockSpec(memory_space=pltpu.MemorySpace.VMEM)
    out_tm, hT = pl.pallas_call(
        _decoder_rnn_kernel,
        out_shape=(jax.ShapeDtypeStruct((T * B, O), x.dtype),
                   jax.ShapeDtypeStruct((B, H), x.dtype)),
        in_specs=[vmem, vmem, vmem, vmem],
        out_specs=(vmem, vmem),
        scratch_shapes=[pltpu.VMEM((T * B, H), jnp.float32)],
    )(x_tm, h0, w_pack, b_pack)

    # Free reshape + tiny back-transpose of the (T, B, O) result; newaxis for hidden.
    out = jnp.swapaxes(out_tm.reshape(T, B, O), 0, 1)   # (B, T, O)
    return out, hT[None, :, :]                           # (1, B, H)


def init_params(key, H, O):
    """Deterministic init mirroring PyTorch's U(-1/sqrt(H), 1/sqrt(H))."""
    ks = jax.random.split(key, 6)
    bound = 1.0 / jnp.sqrt(jnp.float32(H))
    u = lambda k, shape: jax.random.uniform(k, shape, jnp.float32, -bound, bound)
    return {
        "w_ih": u(ks[0], (H, H)),
        "w_hh": u(ks[1], (H, H)),
        "b_ih": u(ks[2], (H,)),
        "b_hh": u(ks[3], (H,)),
        "w_fc": u(ks[4], (O, H)),
        "b_fc": u(ks[5], (O,)),
    }


def reference_forward(x, hidden, p):
    """Pure-JAX reference of the PyTorch semantics (lax.scan over time)."""
    def step(h, x_t):
        h_new = jnp.tanh(x_t @ p["w_ih"].T + p["b_ih"] + h @ p["w_hh"].T + p["b_hh"])
        return h_new, h_new
    hT, hs = jax.lax.scan(step, hidden[0], jnp.transpose(x, (1, 0, 2)))
    out = jnp.transpose(hs, (1, 0, 2)) @ p["w_fc"].T + p["b_fc"]
    return out, hT[None, :, :]


if __name__ == "__main__":
    B, T, H, O = 2, 8, hidden_size, output_size
    key = jax.random.PRNGKey(0)
    kx, kh, kp = jax.random.split(key, 3)

    x = jax.random.normal(kx, (B, T, H), dtype=jnp.float32)
    hidden = jax.random.normal(kh, (1, B, H), dtype=jnp.float32)
    params = init_params(kp, H, O)

    # Pack parameters ONCE (outside the per-call path).
    packed = pack_decoder_params(params)
    jax.block_until_ready(packed)

    fwd = jax.jit(decoder_rnn_forward)
    out, h_final = fwd(x, hidden, packed)
    jax.block_until_ready((out, h_final))

    out_ref, h_ref = reference_forward(x, hidden, params)
    assert out.shape == (B, T, O) and h_final.shape == (1, B, H)
    assert jnp.allclose(out, out_ref, atol=1e-5, rtol=1e-5)
    assert jnp.allclose(h_final, h_ref, atol=1e-5, rtol=1e-5)

    print("KERNEL_OK")
</pallas_src>

<mosaic_0001>
module attributes {stable_mosaic.version = 11 : i64} {
  func.func @_decoder_rnn_kernel(%arg0: memref<16x10xf32, #tpu.memory_space<vmem>>, %arg1: memref<2x10xf32, #tpu.memory_space<vmem>>, %arg2: memref<10x25xf32, #tpu.memory_space<vmem>>, %arg3: memref<1x15xf32, #tpu.memory_space<vmem>>, %arg4: memref<16x5xf32, #tpu.memory_space<vmem>>, %arg5: memref<2x10xf32, #tpu.memory_space<vmem>>, %arg6: memref<16x10xf32, #tpu.memory_space<vmem>>) attributes {dimension_semantics = [], scalar_prefetch = 0 : i64, scratch_operands = 1 : i64, tpu.core_type = #tpu.core_type<tc>} {
    %c0 = arith.constant 0 : index
    %c0_0 = arith.constant 0 : index
    %0 = vector.load %arg2[%c0, %c0_0] : memref<10x25xf32, #tpu.memory_space<vmem>>, vector<10x10xf32>
    %c0_1 = arith.constant 0 : index
    %c10 = arith.constant 10 : index
    %1 = vector.load %arg2[%c0_1, %c10] : memref<10x25xf32, #tpu.memory_space<vmem>>, vector<10x10xf32>
    %c0_2 = arith.constant 0 : index
    %c20 = arith.constant 20 : index
    %2 = vector.load %arg2[%c0_2, %c20] : memref<10x25xf32, #tpu.memory_space<vmem>>, vector<10x5xf32>
    %c0_3 = arith.constant 0 : index
    %c0_4 = arith.constant 0 : index
    %3 = vector.load %arg3[%c0_3, %c0_4] : memref<1x15xf32, #tpu.memory_space<vmem>>, vector<1x10xf32>
    %c0_5 = arith.constant 0 : index
    %c10_6 = arith.constant 10 : index
    %4 = vector.load %arg3[%c0_5, %c10_6] : memref<1x15xf32, #tpu.memory_space<vmem>>, vector<1x5xf32>
    %c0_7 = arith.constant 0 : index
    %c0_8 = arith.constant 0 : index
    %5 = vector.load %arg0[%c0_7, %c0_8] : memref<16x10xf32, #tpu.memory_space<vmem>>, vector<16x10xf32>
    %cst = arith.constant dense<0.000000e+00> : vector<16x10xf32>
    %6 = tpu.matmul %5, %0, %cst {dimension_numbers = #tpu.dot_dimension_numbers<[1], [0], [0], [1], [0, 0, 1, 1], [], []>} : vector<16x10xf32>, vector<10x10xf32>, vector<16x10xf32> -> vector<16x10xf32>
    %7 = vector.broadcast %3 : vector<1x10xf32> to vector<16x10xf32>
    %8 = arith.addf %6, %7 : vector<16x10xf32>
    %c0_9 = arith.constant 0 : index
    %c0_10 = arith.constant 0 : index
    %9 = vector.load %arg1[%c0_9, %c0_10] : memref<2x10xf32, #tpu.memory_space<vmem>>, vector<2x10xf32>
    %10 = vector.extract_strided_slice %8 {offsets = [0, 0], sizes = [2, 10], strides = [1, 1]} : vector<16x10xf32> to vector<2x10xf32>
    %cst_11 = arith.constant dense<0.000000e+00> : vector<2x10xf32>
    %11 = tpu.matmul %9, %1, %cst_11 {dimension_numbers = #tpu.dot_dimension_numbers<[1], [0], [0], [1], [0, 0, 1, 1], [], []>} : vector<2x10xf32>, vector<10x10xf32>, vector<2x10xf32> -> vector<2x10xf32>
    %12 = arith.addf %10, %11 : vector<2x10xf32>
    %13 = math.tanh %12 : vector<2x10xf32>
    %c0_12 = arith.constant 0 : index
    %c0_13 = arith.constant 0 : index
    %14 = vector.load %arg6[%c0_12, %c0_13] : memref<16x10xf32, #tpu.memory_space<vmem>>, vector<2x10xf32>
    tpu.vector_store %arg6[%c0_12, %c0_13], %13 {strides = array<i32>} : memref<16x10xf32, #tpu.memory_space<vmem>>, vector<2x10xf32>,
    %15 = vector.extract_strided_slice %8 {offsets = [2, 0], sizes = [2, 10], strides = [1, 1]} : vector<16x10xf32> to vector<2x10xf32>
    %cst_14 = arith.constant dense<0.000000e+00> : vector<2x10xf32>
    %16 = tpu.matmul %13, %1, %cst_14 {dimension_numbers = #tpu.dot_dimension_numbers<[1], [0], [0], [1], [0, 0, 1, 1], [], []>} : vector<2x10xf32>, vector<10x10xf32>, vector<2x10xf32> -> vector<2x10xf32>
    %17 = arith.addf %15, %16 : vector<2x10xf32>
    %18 = math.tanh %17 : vector<2x10xf32>
    %c2 = arith.constant 2 : index
    %c0_15 = arith.constant 0 : index
    %19 = vector.load %arg6[%c2, %c0_15] : memref<16x10xf32, #tpu.memory_space<vmem>>, vector<2x10xf32>
    tpu.vector_store %arg6[%c2, %c0_15], %18 {strides = array<i32>} : memref<16x10xf32, #tpu.memory_space<vmem>>, vector<2x10xf32>,
    %20 = vector.extract_strided_slice %8 {offsets = [4, 0], sizes = [2, 10], strides = [1, 1]} : vector<16x10xf32> to vector<2x10xf32>
    %cst_16 = arith.constant dense<0.000000e+00> : vector<2x10xf32>
    %21 = tpu.matmul %18, %1, %cst_16 {dimension_numbers = #tpu.dot_dimension_numbers<[1], [0], [0], [1], [0, 0, 1, 1], [], []>} : vector<2x10xf32>, vector<10x10xf32>, vector<2x10xf32> -> vector<2x10xf32>
    %22 = arith.addf %20, %21 : vector<2x10xf32>
    %23 = math.tanh %22 : vector<2x10xf32>
    %c4 = arith.constant 4 : index
    %c0_17 = arith.constant 0 : index
    %24 = vector.load %arg6[%c4, %c0_17] : memref<16x10xf32, #tpu.memory_space<vmem>>, vector<2x10xf32>
    tpu.vector_store %arg6[%c4, %c0_17], %23 {strides = array<i32>} : memref<16x10xf32, #tpu.memory_space<vmem>>, vector<2x10xf32>,
    %25 = vector.extract_strided_slice %8 {offsets = [6, 0], sizes = [2, 10], strides = [1, 1]} : vector<16x10xf32> to vector<2x10xf32>
    %cst_18 = arith.constant dense<0.000000e+00> : vector<2x10xf32>
    %26 = tpu.matmul %23, %1, %cst_18 {dimension_numbers = #tpu.dot_dimension_numbers<[1], [0], [0], [1], [0, 0, 1, 1], [], []>} : vector<2x10xf32>, vector<10x10xf32>, vector<2x10xf32> -> vector<2x10xf32>
    %27 = arith.addf %25, %26 : vector<2x10xf32>
    %28 = math.tanh %27 : vector<2x10xf32>
    %c6 = arith.constant 6 : index
    %c0_19 = arith.constant 0 : index
    %29 = vector.load %arg6[%c6, %c0_19] : memref<16x10xf32, #tpu.memory_space<vmem>>, vector<2x10xf32>
    tpu.vector_store %arg6[%c6, %c0_19], %28 {strides = array<i32>} : memref<16x10xf32, #tpu.memory_space<vmem>>, vector<2x10xf32>,
    %30 = vector.extract_strided_slice %8 {offsets = [8, 0], sizes = [2, 10], strides = [1, 1]} : vector<16x10xf32> to vector<2x10xf32>
    %cst_20 = arith.constant dense<0.000000e+00> : vector<2x10xf32>
    %31 = tpu.matmul %28, %1, %cst_20 {dimension_numbers = #tpu.dot_dimension_numbers<[1], [0], [0], [1], [0, 0, 1, 1], [], []>} : vector<2x10xf32>, vector<10x10xf32>, vector<2x10xf32> -> vector<2x10xf32>
    %32 = arith.addf %30, %31 : vector<2x10xf32>
    %33 = math.tanh %32 : vector<2x10xf32>
    %c8 = arith.constant 8 : index
    %c0_21 = arith.constant 0 : index
    %34 = vector.load %arg6[%c8, %c0_21] : memref<16x10xf32, #tpu.memory_space<vmem>>, vector<2x10xf32>
    tpu.vector_store %arg6[%c8, %c0_21], %33 {strides = array<i32>} : memref<16x10xf32, #tpu.memory_space<vmem>>, vector<2x10xf32>,
    %35 = vector.extract_strided_slice %8 {offsets = [10, 0], sizes = [2, 10], strides = [1, 1]} : vector<16x10xf32> to vector<2x10xf32>
    %cst_22 = arith.constant dense<0.000000e+00> : vector<2x10xf32>
    %36 = tpu.matmul %33, %1, %cst_22 {dimension_numbers = #tpu.dot_dimension_numbers<[1], [0], [0], [1], [0, 0, 1, 1], [], []>} : vector<2x10xf32>, vector<10x10xf32>, vector<2x10xf32> -> vector<2x10xf32>
    %37 = arith.addf %35, %36 : vector<2x10xf32>
    %38 = math.tanh %37 : vector<2x10xf32>
    %c10_23 = arith.constant 10 : index
    %c0_24 = arith.constant 0 : index
    %39 = vector.load %arg6[%c10_23, %c0_24] : memref<16x10xf32, #tpu.memory_space<vmem>>, vector<2x10xf32>
    tpu.vector_store %arg6[%c10_23, %c0_24], %38 {strides = array<i32>} : memref<16x10xf32, #tpu.memory_space<vmem>>, vector<2x10xf32>,
    %40 = vector.extract_strided_slice %8 {offsets = [12, 0], sizes = [2, 10], strides = [1, 1]} : vector<16x10xf32> to vector<2x10xf32>
    %cst_25 = arith.constant dense<0.000000e+00> : vector<2x10xf32>
    %41 = tpu.matmul %38, %1, %cst_25 {dimension_numbers = #tpu.dot_dimension_numbers<[1], [0], [0], [1], [0, 0, 1, 1], [], []>} : vector<2x10xf32>, vector<10x10xf32>, vector<2x10xf32> -> vector<2x10xf32>
    %42 = arith.addf %40, %41 : vector<2x10xf32>
    %43 = math.tanh %42 : vector<2x10xf32>
    %c12 = arith.constant 12 : index
    %c0_26 = arith.constant 0 : index
    %44 = vector.load %arg6[%c12, %c0_26] : memref<16x10xf32, #tpu.memory_space<vmem>>, vector<2x10xf32>
    tpu.vector_store %arg6[%c12, %c0_26], %43 {strides = array<i32>} : memref<16x10xf32, #tpu.memory_space<vmem>>, vector<2x10xf32>,
    %45 = vector.extract_strided_slice %8 {offsets = [14, 0], sizes = [2, 10], strides = [1, 1]} : vector<16x10xf32> to vector<2x10xf32>
    %cst_27 = arith.constant dense<0.000000e+00> : vector<2x10xf32>
    %46 = tpu.matmul %43, %1, %cst_27 {dimension_numbers = #tpu.dot_dimension_numbers<[1], [0], [0], [1], [0, 0, 1, 1], [], []>} : vector<2x10xf32>, vector<10x10xf32>, vector<2x10xf32> -> vector<2x10xf32>
    %47 = arith.addf %45, %46 : vector<2x10xf32>
    %48 = math.tanh %47 : vector<2x10xf32>
    %c14 = arith.constant 14 : index
    %c0_28 = arith.constant 0 : index
    %49 = vector.load %arg6[%c14, %c0_28] : memref<16x10xf32, #tpu.memory_space<vmem>>, vector<2x10xf32>
    tpu.vector_store %arg6[%c14, %c0_28], %48 {strides = array<i32>} : memref<16x10xf32, #tpu.memory_space<vmem>>, vector<2x10xf32>,
    %c0_29 = arith.constant 0 : index
    %c0_30 = arith.constant 0 : index
    %50 = vector.load %arg5[%c0_29, %c0_30] : memref<2x10xf32, #tpu.memory_space<vmem>>, vector<2x10xf32>
    tpu.vector_store %arg5[%c0_29, %c0_30], %48 {strides = array<i32>} : memref<2x10xf32, #tpu.memory_space<vmem>>, vector<2x10xf32>,
    %c0_31 = arith.constant 0 : index
    %c0_32 = arith.constant 0 : index
    %51 = vector.load %arg6[%c0_31, %c0_32] : memref<16x10xf32, #tpu.memory_space<vmem>>, vector<16x10xf32>
    %cst_33 = arith.constant dense<0.000000e+00> : vector<16x5xf32>
    %52 = tpu.matmul %51, %2, %cst_33 {dimension_numbers = #tpu.dot_dimension_numbers<[1], [0], [0], [1], [0, 0, 1, 1], [], []>} : vector<16x10xf32>, vector<10x5xf32>, vector<16x5xf32> -> vector<16x5xf32>
    %53 = vector.broadcast %4 : vector<1x5xf32> to vector<16x5xf32>
    %54 = arith.addf %52, %53 : vector<16x5xf32>
    %c0_34 = arith.constant 0 : index
    %c0_35 = arith.constant 0 : index
    %55 = vector.load %arg4[%c0_34, %c0_35] : memref<16x5xf32, #tpu.memory_space<vmem>>, vector<16x5xf32>
    tpu.vector_store %arg4[%c0_34, %c0_35], %54 {strides = array<i32>} : memref<16x5xf32, #tpu.memory_space<vmem>>, vector<16x5xf32>,
    return
  }
}

</mosaic_0001>

<llo_original>
// kernel: decoder_rnn_forward.1
$region0: #{decoder_rnn_forward.1}
  #allocation0 [shape = 'u32[]', space=smem, size = 0x4, offset = 0x4, fixed_abs, tag = 'smem constant byte address 0x4 - core index']
  #allocation1 [shape = 'u32[144,128]{1,0:T(1,128)}', space=vmem, size = 0x12000, scoped, tag = 'internal scratch']
  #allocation2 [shape = 'f32[16,10]{1,0:T(8,128)}', space=vmem, size = 0x2000, scoped, tag = 'scratch operand']
  %s0 = inlined_call_operand.vmem [shape: f32[16,10], index: 0, kind: input, shape index: {}]
  %s1 = inlined_call_operand.vmem [shape: f32[2,10], index: 1, kind: input, shape index: {}]
  %s2 = inlined_call_operand.vmem [shape: f32[10,25], index: 2, kind: input, shape index: {}]
  %s3 = inlined_call_operand.vmem [shape: f32[1,15], index: 3, kind: input, shape index: {}]
  %s4 = inlined_call_operand.vmem [shape: f32[16,5], index: 4, kind: output, shape index: {0}]
  %s5 = inlined_call_operand.hbm [shape: f32[2,10], index: 5, kind: output, shape index: {1}]
  %6 = xla_tuple %s4, %s5
  %s7 = sld [smem:[#allocation0]]
  $region34: #{decoder_rnn_forward.1} parent=0
    _
  %s9 = ssub.s32 1, %s7
  %s10 = scalar_select 0, %s9, %s7
  $region1: #{decoder_rnn_forward.1} parent=0
    #allocation3 [shape = 'u8[1024]{0}', space=vmem, size = 0x400, scoped, tag = 'output window, operand 1, single buffered']
    #allocation4 [shape = 's32[1]{0}', space=sflag, size = 0x4, scoped, tag = 'scoped memory for decoder_rnn_forward.1']
    %11 = vsyncpa [#allocation4], 0
    // Predicated region
    $region2: #{decoder_rnn_forward.1} parent=1 // pred_check
      _
    $region3: #{decoder_rnn_forward.1} parent=1 // pred_check_branch
      %13 = sbr.rel (0) target = $region5
    $region4: #{decoder_rnn_forward.1} parent=1 // pred_region
      _
    $region5: #{decoder_rnn_forward.1} parent=1 // pred_fallthru
      _
    // Predicated region
    $region6: #{decoder_rnn_forward.1} parent=1 // pred_check
      _
    $region7: #{decoder_rnn_forward.1} parent=1 // pred_check_branch
      %15 = sbr.rel (0) target = $region9
    $region8: #{decoder_rnn_forward.1} parent=1 // pred_region
      _
    $region9: #{decoder_rnn_forward.1} parent=1 // pred_fallthru
      _
    // Predicated region
    $region10: #{decoder_rnn_forward.1} parent=1 // pred_check
      _
    $region11: #{decoder_rnn_forward.1} parent=1 // pred_check_branch
      %17 = sbr.rel (0) target = $region13
    $region12: #{decoder_rnn_forward.1} parent=1 // pred_region
      _
    $region13: #{decoder_rnn_forward.1} parent=1 // pred_fallthru
      _
    // Predicated region
    $region14: #{decoder_rnn_forward.1} parent=1 // pred_check
      _
    $region15: #{decoder_rnn_forward.1} parent=1 // pred_check_branch
      %19 = sbr.rel (0) target = $region17
    $region16: #{decoder_rnn_forward.1} parent=1 // pred_region
      _
    $region17: #{decoder_rnn_forward.1} parent=1 // pred_fallthru
      _
    %v20 = vld [vmem:[%s2] sm:$0xff]
    %v21 = vld [vmem:[%s2 + $0x8] sm:$0x3]
    %v22 = vld [vmem:[%s3] sm:$0x1]
    %v23 = vld [vmem:[%s0] sm:$0xff]
    %v24 = vld [vmem:[%s0 + $0x8] sm:$0xff]
    %v26 = vlaneseq
    %v27 = vshrl.u32 %v26, 7
    %v28 = vsub.s32 0, %v27
    %v29 = vrot.slane %v22, %v28
    %vm31 = vcmask 80896
    %v33 = vsel %vm31, %v23, 0
    %v36 = vsel %vm31, %v24, 0
    %vm38 = vcmask 1041408
    %v40 = vsel %vm38, %v21, 0
    %42 = vmatprep.subr.mxu0 0.0
    %43 = vmatpush1.msra.mxu0 %v20
    %44 = vmatprep.subr.mxu0 0.0
    %45 = vmatpush1.msra.mxu0 %v40
    %46 = vmatprep.subr.mxu0 0.0
    %47 = vmatpush1.msra.mxu0 0.0
    %48 = vmatprep.subr.mxu0 0.0
    %49 = vmatpush1.msra.mxu0 0.0
    %50 = vmatprep.subr.mxu0 0.0
    %51 = vmatpush1.msra.mxu0 0.0
    %52 = vmatprep.subr.mxu0 0.0
    %53 = vmatpush1.msra.mxu0 0.0
    %54 = vmatprep.subr.mxu0 0.0
    %55 = vmatpush1.msra.mxu0 0.0
    %56 = vmatprep.subr.mxu0 0.0
    %57 = vmatpush1.msra.mxu0 0.0
    %58 = vmatprep.subr.mxu0 0.0
    %59 = vmatpush1.msra.mxu0 0.0
    %60 = vmatprep.subr.mxu0 0.0
    %61 = vmatpush1.msra.mxu0 0.0
    %62 = vmatprep.subr.mxu0 0.0
    %63 = vmatpush1.msra.mxu0 0.0
    %64 = vmatprep.subr.mxu0 0.0
    %65 = vmatpush1.msra.mxu0 0.0
    %66 = vmatprep.subr.mxu0 0.0
    %67 = vmatpush1.msra.mxu0 0.0
    %68 = vmatprep.subr.mxu0 0.0
    %69 = vmatpush1.msra.mxu0 0.0
    %70 = vmatprep.subr.mxu0 0.0
    %71 = vmatpush1.msra.mxu0 0.0
    %72 = vmatprep.subr.mxu0 0.0
    %73 = vmatpush1.msra.mxu0 0.0
    %74 = vmatprep.subr.mxu0 0.0
    %75 = vmatpush1.msra.mxu0 0.0
    %76 = vmatprep.subr.mxu0 0.0
    %77 = vmatpush1.msra.mxu0 0.0
    %78 = vmatprep.subr.mxu0 0.0
    %79 = vmatpush1.msra.mxu0 0.0
    %80 = vmatprep.subr.mxu0 0.0
    %81 = vmatpush1.msra.mxu0 0.0
    %82 = vmatprep.subr.mxu0 0.0
    %83 = vmatpush1.msra.mxu0 0.0
    %84 = vmatprep.subr.mxu0 0.0
    %85 = vmatpush1.msra.mxu0 0.0
    %86 = vmatprep.subr.mxu0 0.0
    %87 = vmatpush1.msra.mxu0 0.0
    %88 = vmatprep.subr.mxu0 0.0
    %89 = vmatpush1.msra.mxu0 0.0
    %90 = vmatprep.subr.mxu0 0.0
    %91 = vmatpush1.msra.mxu0 0.0
    %92 = vmatprep.subr.mxu0 0.0
    %93 = vmatpush1.msra.mxu0 0.0
    %94 = vmatprep.subr.mxu0 0.0
    %95 = vmatpush1.msra.mxu0 0.0
    %96 = vmatprep.subr.mxu0 0.0
    %97 = vmatpush1.msra.mxu0 0.0
    %98 = vmatprep.subr.mxu0 0.0
    %99 = vmatpush1.msra.mxu0 0.0
    %100 = vmatprep.subr.mxu0 0.0
    %101 = vmatpush1.msra.mxu0 0.0
    %102 = vmatprep.subr.mxu0 0.0
    %103 = vmatpush1.msra.mxu0 0.0
    %104 = vmatprep.subr.mxu0 0.0
    %105 = vmatpush1.msra.mxu0 0.0
    %106 = vmatprep.mubr.f32.mxu0 0.0
    %107 = vmatmul.mubr.f32.gmra.mrb[0].mxu0 %v33
    %v108 = vpop.f32.mrb[0].mxu0
    %v109 = vadd.f32 %v29, %v108
    %v110 = vpop.f32.mrb[0].mxu0
    %111 = vmatprep.mubr.f32.mxu0 0.0
    %112 = vmatmul.mubr.f32.gmra.mrb[0].mxu0 %v36
    %v113 = vpop.f32.mrb[0].mxu0
    %v114 = vadd.f32 %v29, %v113
    %v115 = vpop.f32.mrb[0].mxu0
    %116 = vdwg.mxu0
    %v117 = vld [vmem:[%s1] sm:$0x3]
    %119 = vrot.lane.b32.xlu0 %v20, 118
    %v120 = vpop.permute.xlu0 %119
    %121 = vrot.lane.b32.xlu0 %v21, 118
    %v122 = vpop.permute.xlu0 %121
    %v125 = vsel %vm31, %v117, 0
    %v127 = vsel %vm38, %v122, 0
    %129 = vmatprep.subr.mxu0 0.0
    %130 = vmatpush1.msra.mxu0 %v120
    %131 = vmatprep.subr.mxu0 0.0
    %132 = vmatpush1.msra.mxu0 %v127
    %133 = vmatprep.subr.mxu0 0.0
    %134 = vmatpush1.msra.mxu0 0.0
    %135 = vmatprep.subr.mxu0 0.0
    %136 = vmatpush1.msra.mxu0 0.0
    %137 = vmatprep.subr.mxu0 0.0
    %138 = vmatpush1.msra.mxu0 0.0
    %139 = vmatprep.subr.mxu0 0.0
    %140 = vmatpush1.msra.mxu0 0.0
    %141 = vmatprep.subr.mxu0 0.0
    %142 = vmatpush1.msra.mxu0 0.0
    %143 = vmatprep.subr.mxu0 0.0
    %144 = vmatpush1.msra.mxu0 0.0
    %145 = vmatprep.subr.mxu0 0.0
    %146 = vmatpush1.msra.mxu0 0.0
    %147 = vmatprep.subr.mxu0 0.0
    %148 = vmatpush1.msra.mxu0 0.0
    %149 = vmatprep.subr.mxu0 0.0
    %150 = vmatpush1.msra.mxu0 0.0
    %151 = vmatprep.subr.mxu0 0.0
    %152 = vmatpush1.msra.mxu0 0.0
    %153 = vmatprep.subr.mxu0 0.0
    %154 = vmatpush1.msra.mxu0 0.0
    %155 = vmatprep.subr.mxu0 0.0
    %156 = vmatpush1.msra.mxu0 0.0
    %157 = vmatprep.subr.mxu0 0.0
    %158 = vmatpush1.msra.mxu0 0.0
    %159 = vmatprep.subr.mxu0 0.0
    %160 = vmatpush1.msra.mxu0 0.0
    %161 = vmatprep.subr.mxu0 0.0
    %162 = vmatpush1.msra.mxu0 0.0
    %163 = vmatprep.subr.mxu0 0.0
    %164 = vmatpush1.msra.mxu0 0.0
    %165 = vmatprep.subr.mxu0 0.0
    %166 = vmatpush1.msra.mxu0 0.0
    %167 = vmatprep.subr.mxu0 0.0
    %168 = vmatpush1.msra.mxu0 0.0
    %169 = vmatprep.subr.mxu0 0.0
    %170 = vmatpush1.msra.mxu0 0.0
    %171 = vmatprep.subr.mxu0 0.0
    %172 = vmatpush1.msra.mxu0 0.0
    %173 = vmatprep.subr.mxu0 0.0
    %174 = vmatpush1.msra.mxu0 0.0
    %175 = vmatprep.subr.mxu0 0.0
    %176 = vmatpush1.msra.mxu0 0.0
    %177 = vmatprep.subr.mxu0 0.0
    %178 = vmatpush1.msra.mxu0 0.0
    %179 = vmatprep.subr.mxu0 0.0
    %180 = vmatpush1.msra.mxu0 0.0
    %181 = vmatprep.subr.mxu0 0.0
    %182 = vmatpush1.msra.mxu0 0.0
    %183 = vmatprep.subr.mxu0 0.0
    %184 = vmatpush1.msra.mxu0 0.0
    %185 = vmatprep.subr.mxu0 0.0
    %186 = vmatpush1.msra.mxu0 0.0
    %187 = vmatprep.subr.mxu0 0.0
    %188 = vmatpush1.msra.mxu0 0.0
    %189 = vmatprep.subr.mxu0 0.0
    %190 = vmatpush1.msra.mxu0 0.0
    %191 = vmatprep.subr.mxu0 0.0
    %192 = vmatpush1.msra.mxu0 0.0
    %193 = vmatprep.mubr.f32.mxu0 0.0
    %194 = vmatmul.mubr.f32.gmra.mrb[0].mxu0 %v125
    %v195 = vpop.f32.mrb[0].mxu0
    %v196 = vadd.f32 0.0, %v195
    %v197 = vpop.f32.mrb[0].mxu0
    %198 = vdwg.mxu0
    %v199 = vadd.f32 %v109, %v196
    %v200 = vtanh.pop %v199
    %vm201 = vcmask 74752
    %202 = vst.msk [vmem:[#allocation2] sm:$0x3] %vm201, %v200
    %v204 = vsel %vm31, %v200, 0
    %206 = vmatprep.subr.mxu0 0.0
    %207 = vmatpush1.msra.mxu0 %v120
    %208 = vmatprep.subr.mxu0 0.0
    %209 = vmatpush1.msra.mxu0 %v127
    %210 = vmatprep.subr.mxu0 0.0
    %211 = vmatpush1.msra.mxu0 0.0
    %212 = vmatprep.subr.mxu0 0.0
    %213 = vmatpush1.msra.mxu0 0.0
    %214 = vmatprep.subr.mxu0 0.0
    %215 = vmatpush1.msra.mxu0 0.0
    %216 = vmatprep.subr.mxu0 0.0
    %217 = vmatpush1.msra.mxu0 0.0
    %218 = vmatprep.subr.mxu0 0.0
    %219 = vmatpush1.msra.mxu0 0.0
    %220 = vmatprep.subr.mxu0 0.0
    %221 = vmatpush1.msra.mxu0 0.0
    %222 = vmatprep.subr.mxu0 0.0
    %223 = vmatpush1.msra.mxu0 0.0
    %224 = vmatprep.subr.mxu0 0.0
    %225 = vmatpush1.msra.mxu0 0.0
    %226 = vmatprep.subr.mxu0 0.0
    %227 = vmatpush1.msra.mxu0 0.0
    %228 = vmatprep.subr.mxu0 0.0
    %229 = vmatpush1.msra.mxu0 0.0
    %230 = vmatprep.subr.mxu0 0.0
    %231 = vmatpush1.msra.mxu0 0.0
    %232 = vmatprep.subr.mxu0 0.0
    %233 = vmatpush1.msra.mxu0 0.0
    %234 = vmatprep.subr.mxu0 0.0
    %235 = vmatpush1.msra.mxu0 0.0
    %236 = vmatprep.subr.mxu0 0.0
    %237 = vmatpush1.msra.mxu0 0.0
    %238 = vmatprep.subr.mxu0 0.0
    %239 = vmatpush1.msra.mxu0 0.0
    %240 = vmatprep.subr.mxu0 0.0
    %241 = vmatpush1.msra.mxu0 0.0
    %242 = vmatprep.subr.mxu0 0.0
    %243 = vmatpush1.msra.mxu0 0.0
    %244 = vmatprep.subr.mxu0 0.0
    %245 = vmatpush1.msra.mxu0 0.0
    %246 = vmatprep.subr.mxu0 0.0
    %247 = vmatpush1.msra.mxu0 0.0
    %248 = vmatprep.subr.mxu0 0.0
    %249 = vmatpush1.msra.mxu0 0.0
    %250 = vmatprep.subr.mxu0 0.0
    %251 = vmatpush1.msra.mxu0 0.0
    %252 = vmatprep.subr.mxu0 0.0
    %253 = vmatpush1.msra.mxu0 0.0
    %254 = vmatprep.subr.mxu0 0.0
    %255 = vmatpush1.msra.mxu0 0.0
    %256 = vmatprep.subr.mxu0 0.0
    %257 = vmatpush1.msra.mxu0 0.0
    %258 = vmatprep.subr.mxu0 0.0
    %259 = vmatpush1.msra.mxu0 0.0
    %260 = vmatprep.subr.mxu0 0.0
    %261 = vmatpush1.msra.mxu0 0.0
    %262 = vmatprep.subr.mxu0 0.0
    %263 = vmatpush1.msra.mxu0 0.0
    %264 = vmatprep.subr.mxu0 0.0
    %265 = vmatpush1.msra.mxu0 0.0
    %266 = vmatprep.subr.mxu0 0.0
    %267 = vmatpush1.msra.mxu0 0.0
    %268 = vmatprep.subr.mxu0 0.0
    %269 = vmatpush1.msra.mxu0 0.0
    %270 = vmatprep.mubr.f32.mxu0 0.0
    %271 = vmatmul.mubr.f32.gmra.mrb[0].mxu0 %v204
    %v272 = vpop.f32.mrb[0].mxu0
    %v273 = vadd.f32 0.0, %v272
    %v274 = vpop.f32.mrb[0].mxu0
    %275 = vdwg.mxu0
    %v277 = vrot.slane %v273, 6
    %v279 = vadd.f32 %v109, %v277
    %v280 = vtanh.pop %v279
    %vm281 = vcmask 76802
    %282 = vst.msk [vmem:[#allocation2] sm:$0xc] %vm281, %v280
    %v284 = vrot.slane %v280, 2
    %v285 = vsel %vm31, %v284, 0
    %287 = vmatprep.subr.mxu0 0.0
    %288 = vmatpush1.msra.mxu0 %v120
    %289 = vmatprep.subr.mxu0 0.0
    %290 = vmatpush1.msra.mxu0 %v127
    %291 = vmatprep.subr.mxu0 0.0
    %292 = vmatpush1.msra.mxu0 0.0
    %293 = vmatprep.subr.mxu0 0.0
    %294 = vmatpush1.msra.mxu0 0.0
    %295 = vmatprep.subr.mxu0 0.0
    %296 = vmatpush1.msra.mxu0 0.0
    %297 = vmatprep.subr.mxu0 0.0
    %298 = vmatpush1.msra.mxu0 0.0
    %299 = vmatprep.subr.mxu0 0.0
    %300 = vmatpush1.msra.mxu0 0.0
    %301 = vmatprep.subr.mxu0 0.0
    %302 = vmatpush1.msra.mxu0 0.0
    %303 = vmatprep.subr.mxu0 0.0
    %304 = vmatpush1.msra.mxu0 0.0
    %305 = vmatprep.subr.mxu0 0.0
    %306 = vmatpush1.msra.mxu0 0.0
    %307 = vmatprep.subr.mxu0 0.0
    %308 = vmatpush1.msra.mxu0 0.0
    %309 = vmatprep.subr.mxu0 0.0
    %310 = vmatpush1.msra.mxu0 0.0
    %311 = vmatprep.subr.mxu0 0.0
    %312 = vmatpush1.msra.mxu0 0.0
    %313 = vmatprep.subr.mxu0 0.0
    %314 = vmatpush1.msra.mxu0 0.0
    %315 = vmatprep.subr.mxu0 0.0
    %316 = vmatpush1.msra.mxu0 0.0
    %317 = vmatprep.subr.mxu0 0.0
    %318 = vmatpush1.msra.mxu0 0.0
    %319 = vmatprep.subr.mxu0 0.0
    %320 = vmatpush1.msra.mxu0 0.0
    %321 = vmatprep.subr.mxu0 0.0
    %322 = vmatpush1.msra.mxu0 0.0
    %323 = vmatprep.subr.mxu0 0.0
    %324 = vmatpush1.msra.mxu0 0.0
    %325 = vmatprep.subr.mxu0 0.0
    %326 = vmatpush1.msra.mxu0 0.0
    %327 = vmatprep.subr.mxu0 0.0
    %328 = vmatpush1.msra.mxu0 0.0
    %329 = vmatprep.subr.mxu0 0.0
    %330 = vmatpush1.msra.mxu0 0.0
    %331 = vmatprep.subr.mxu0 0.0
    %332 = vmatpush1.msra.mxu0 0.0
    %333 = vmatprep.subr.mxu0 0.0
    %334 = vmatpush1.msra.mxu0 0.0
    %335 = vmatprep.subr.mxu0 0.0
    %336 = vmatpush1.msra.mxu0 0.0
    %337 = vmatprep.subr.mxu0 0.0
    %338 = vmatpush1.msra.mxu0 0.0
    %339 = vmatprep.subr.mxu0 0.0
    %340 = vmatpush1.msra.mxu0 0.0
    %341 = vmatprep.subr.mxu0 0.0
    %342 = vmatpush1.msra.mxu0 0.0
    %343 = vmatprep.subr.mxu0 0.0
    %344 = vmatpush1.msra.mxu0 0.0
    %345 = vmatprep.subr.mxu0 0.0
    %346 = vmatpush1.msra.mxu0 0.0
    %347 = vmatprep.subr.mxu0 0.0
    %348 = vmatpush1.msra.mxu0 0.0
    %349 = vmatprep.subr.mxu0 0.0
    %350 = vmatpush1.msra.mxu0 0.0
    %351 = vmatprep.mubr.f32.mxu0 0.0
    %352 = vmatmul.mubr.f32.gmra.mrb[0].mxu0 %v285
    %v353 = vpop.f32.mrb[0].mxu0
    %v354 = vadd.f32 0.0, %v353
    %v355 = vpop.f32.mrb[0].mxu0
    %356 = vdwg.mxu0
    %v358 = vrot.slane %v354, 4
    %v360 = vadd.f32 %v109, %v358
    %v361 = vtanh.pop %v360
    %vm362 = vcmask 78852
    %363 = vst.msk [vmem:[#allocation2] sm:$0x30] %vm362, %v361
    %v365 = vrot.slane %v361, 4
    %v366 = vsel %vm31, %v365, 0
    %368 = vmatprep.subr.mxu0 0.0
    %369 = vmatpush1.msra.mxu0 %v120
    %370 = vmatprep.subr.mxu0 0.0
    %371 = vmatpush1.msra.mxu0 %v127
    %372 = vmatprep.subr.mxu0 0.0
    %373 = vmatpush1.msra.mxu0 0.0
    %374 = vmatprep.subr.mxu0 0.0
    %375 = vmatpush1.msra.mxu0 0.0
    %376 = vmatprep.subr.mxu0 0.0
    %377 = vmatpush1.msra.mxu0 0.0
    %378 = vmatprep.subr.mxu0 0.0
    %379 = vmatpush1.msra.mxu0 0.0
    %380 = vmatprep.subr.mxu0 0.0
    %381 = vmatpush1.msra.mxu0 0.0
    %382 = vmatprep.subr.mxu0 0.0
    %383 = vmatpush1.msra.mxu0 0.0
    %384 = vmatprep.subr.mxu0 0.0
    %385 = vmatpush1.msra.mxu0 0.0
    %386 = vmatprep.subr.mxu0 0.0
    %387 = vmatpush1.msra.mxu0 0.0
    %388 = vmatprep.subr.mxu0 0.0
    %389 = vmatpush1.msra.mxu0 0.0
    %390 = vmatprep.subr.mxu0 0.0
    %391 = vmatpush1.msra.mxu0 0.0
    %392 = vmatprep.subr.mxu0 0.0
    %393 = vmatpush1.msra.mxu0 0.0
    %394 = vmatprep.subr.mxu0 0.0
    %395 = vmatpush1.msra.mxu0 0.0
    %396 = vmatprep.subr.mxu0 0.0
    %397 = vmatpush1.msra.mxu0 0.0
    %398 = vmatprep.subr.mxu0 0.0
    %399 = vmatpush1.msra.mxu0 0.0
    %400 = vmatprep.subr.mxu0 0.0
    %401 = vmatpush1.msra.mxu0 0.0
    %402 = vmatprep.subr.mxu0 0.0
    %403 = vmatpush1.msra.mxu0 0.0
    %404 = vmatprep.subr.mxu0 0.0
    %405 = vmatpush1.msra.mxu0 0.0
    %406 = vmatprep.subr.mxu0 0.0
    %407 = vmatpush1.msra.mxu0 0.0
    %408 = vmatprep.subr.mxu0 0.0
    %409 = vmatpush1.msra.mxu0 0.0
    %410 = vmatprep.subr.mxu0 0.0
    %411 = vmatpush1.msra.mxu0 0.0
    %412 = vmatprep.subr.mxu0 0.0
    %413 = vmatpush1.msra.mxu0 0.0
    %414 = vmatprep.subr.mxu0 0.0
    %415 = vmatpush1.msra.mxu0 0.0
    %416 = vmatprep.subr.mxu0 0.0
    %417 = vmatpush1.msra.mxu0 0.0
    %418 = vmatprep.subr.mxu0 0.0
    %419 = vmatpush1.msra.mxu0 0.0
    %420 = vmatprep.subr.mxu0 0.0
    %421 = vmatpush1.msra.mxu0 0.0
    %422 = vmatprep.subr.mxu0 0.0
    %423 = vmatpush1.msra.mxu0 0.0
    %424 = vmatprep.subr.mxu0 0.0
    %425 = vmatpush1.msra.mxu0 0.0
    %426 = vmatprep.subr.mxu0 0.0
    %427 = vmatpush1.msra.mxu0 0.0
    %428 = vmatprep.subr.mxu0 0.0
    %429 = vmatpush1.msra.mxu0 0.0
    %430 = vmatprep.subr.mxu0 0.0
    %431 = vmatpush1.msra.mxu0 0.0
    %432 = vmatprep.mubr.f32.mxu0 0.0
    %433 = vmatmul.mubr.f32.gmra.mrb[0].mxu0 %v366
    %v434 = vpop.f32.mrb[0].mxu0
    %v435 = vadd.f32 0.0, %v434
    %v436 = vpop.f32.mrb[0].mxu0
    %437 = vdwg.mxu0
    %v439 = vrot.slane %v435, 2
    %v441 = vadd.f32 %v109, %v439
    %v442 = vtanh.pop %v441
    %vm443 = vcmask 80902
    %444 = vst.msk [vmem:[#allocation2] sm:$0xc0] %vm443, %v442
    %v446 = vrot.slane %v442, 6
    %v447 = vsel %vm31, %v446, 0
    %449 = vmatprep.subr.mxu0 0.0
    %450 = vmatpush1.msra.mxu0 %v120
    %451 = vmatprep.subr.mxu0 0.0
    %452 = vmatpush1.msra.mxu0 %v127
    %453 = vmatprep.subr.mxu0 0.0
    %454 = vmatpush1.msra.mxu0 0.0
    %455 = vmatprep.subr.mxu0 0.0
    %456 = vmatpush1.msra.mxu0 0.0
    %457 = vmatprep.subr.mxu0 0.0
    %458 = vmatpush1.msra.mxu0 0.0
    %459 = vmatprep.subr.mxu0 0.0
    %460 = vmatpush1.msra.mxu0 0.0
    %461 = vmatprep.subr.mxu0 0.0
    %462 = vmatpush1.msra.mxu0 0.0
    %463 = vmatprep.subr.mxu0 0.0
    %464 = vmatpush1.msra.mxu0 0.0
    %465 = vmatprep.subr.mxu0 0.0
    %466 = vmatpush1.msra.mxu0 0.0
    %467 = vmatprep.subr.mxu0 0.0
    %468 = vmatpush1.msra.mxu0 0.0
    %469 = vmatprep.subr.mxu0 0.0
    %470 = vmatpush1.msra.mxu0 0.0
    %471 = vmatprep.subr.mxu0 0.0
    %472 = vmatpush1.msra.mxu0 0.0
    %473 = vmatprep.subr.mxu0 0.0
    %474 = vmatpush1.msra.mxu0 0.0
    %475 = vmatprep.subr.mxu0 0.0
    %476 = vmatpush1.msra.mxu0 0.0
    %477 = vmatprep.subr.mxu0 0.0
    %478 = vmatpush1.msra.mxu0 0.0
    %479 = vmatprep.subr.mxu0 0.0
    %480 = vmatpush1.msra.mxu0 0.0
    %481 = vmatprep.subr.mxu0 0.0
    %482 = vmatpush1.msra.mxu0 0.0
    %483 = vmatprep.subr.mxu0 0.0
    %484 = vmatpush1.msra.mxu0 0.0
    %485 = vmatprep.subr.mxu0 0.0
    %486 = vmatpush1.msra.mxu0 0.0
    %487 = vmatprep.subr.mxu0 0.0
    %488 = vmatpush1.msra.mxu0 0.0
    %489 = vmatprep.subr.mxu0 0.0
    %490 = vmatpush1.msra.mxu0 0.0
    %491 = vmatprep.subr.mxu0 0.0
    %492 = vmatpush1.msra.mxu0 0.0
    %493 = vmatprep.subr.mxu0 0.0
    %494 = vmatpush1.msra.mxu0 0.0
    %495 = vmatprep.subr.mxu0 0.0
    %496 = vmatpush1.msra.mxu0 0.0
    %497 = vmatprep.subr.mxu0 0.0
    %498 = vmatpush1.msra.mxu0 0.0
    %499 = vmatprep.subr.mxu0 0.0
    %500 = vmatpush1.msra.mxu0 0.0
    %501 = vmatprep.subr.mxu0 0.0
    %502 = vmatpush1.msra.mxu0 0.0
    %503 = vmatprep.subr.mxu0 0.0
    %504 = vmatpush1.msra.mxu0 0.0
    %505 = vmatprep.subr.mxu0 0.0
    %506 = vmatpush1.msra.mxu0 0.0
    %507 = vmatprep.subr.mxu0 0.0
    %508 = vmatpush1.msra.mxu0 0.0
    %509 = vmatprep.subr.mxu0 0.0
    %510 = vmatpush1.msra.mxu0 0.0
    %511 = vmatprep.subr.mxu0 0.0
    %512 = vmatpush1.msra.mxu0 0.0
    %513 = vmatprep.mubr.f32.mxu0 0.0
    %514 = vmatmul.mubr.f32.gmra.mrb[0].mxu0 %v447
    %v515 = vpop.f32.mrb[0].mxu0
    %v516 = vadd.f32 0.0, %v515
    %v517 = vpop.f32.mrb[0].mxu0
    %518 = vdwg.mxu0
    %v519 = vadd.f32 %v114, %v516
    %v520 = vtanh.pop %v519
    %521 = vst.msk [vmem:[#allocation2 + $0x8] sm:$0x3] %vm201, %v520
    %v523 = vsel %vm31, %v520, 0
    %525 = vmatprep.subr.mxu0 0.0
    %526 = vmatpush1.msra.mxu0 %v120
    %527 = vmatprep.subr.mxu0 0.0
    %528 = vmatpush1.msra.mxu0 %v127
    %529 = vmatprep.subr.mxu0 0.0
    %530 = vmatpush1.msra.mxu0 0.0
    %531 = vmatprep.subr.mxu0 0.0
    %532 = vmatpush1.msra.mxu0 0.0
    %533 = vmatprep.subr.mxu0 0.0
    %534 = vmatpush1.msra.mxu0 0.0
    %535 = vmatprep.subr.mxu0 0.0
    %536 = vmatpush1.msra.mxu0 0.0
    %537 = vmatprep.subr.mxu0 0.0
    %538 = vmatpush1.msra.mxu0 0.0
    %539 = vmatprep.subr.mxu0 0.0
    %540 = vmatpush1.msra.mxu0 0.0
    %541 = vmatprep.subr.mxu0 0.0
    %542 = vmatpush1.msra.mxu0 0.0
    %543 = vmatprep.subr.mxu0 0.0
    %544 = vmatpush1.msra.mxu0 0.0
    %545 = vmatprep.subr.mxu0 0.0
    %546 = vmatpush1.msra.mxu0 0.0
    %547 = vmatprep.subr.mxu0 0.0
    %548 = vmatpush1.msra.mxu0 0.0
    %549 = vmatprep.subr.mxu0 0.0
    %550 = vmatpush1.msra.mxu0 0.0
    %551 = vmatprep.subr.mxu0 0.0
    %552 = vmatpush1.msra.mxu0 0.0
    %553 = vmatprep.subr.mxu0 0.0
    %554 = vmatpush1.msra.mxu0 0.0
    %555 = vmatprep.subr.mxu0 0.0
    %556 = vmatpush1.msra.mxu0 0.0
    %557 = vmatprep.subr.mxu0 0.0
    %558 = vmatpush1.msra.mxu0 0.0
    %559 = vmatprep.subr.mxu0 0.0
    %560 = vmatpush1.msra.mxu0 0.0
    %561 = vmatprep.subr.mxu0 0.0
    %562 = vmatpush1.msra.mxu0 0.0
    %563 = vmatprep.subr.mxu0 0.0
    %564 = vmatpush1.msra.mxu0 0.0
    %565 = vmatprep.subr.mxu0 0.0
    %566 = vmatpush1.msra.mxu0 0.0
    %567 = vmatprep.subr.mxu0 0.0
    %568 = vmatpush1.msra.mxu0 0.0
    %569 = vmatprep.subr.mxu0 0.0
    %570 = vmatpush1.msra.mxu0 0.0
    %571 = vmatprep.subr.mxu0 0.0
    %572 = vmatpush1.msra.mxu0 0.0
    %573 = vmatprep.subr.mxu0 0.0
    %574 = vmatpush1.msra.mxu0 0.0
    %575 = vmatprep.subr.mxu0 0.0
    %576 = vmatpush1.msra.mxu0 0.0
    %577 = vmatprep.subr.mxu0 0.0
    %578 = vmatpush1.msra.mxu0 0.0
    %579 = vmatprep.subr.mxu0 0.0
    %580 = vmatpush1.msra.mxu0 0.0
    %581 = vmatprep.subr.mxu0 0.0
    %582 = vmatpush1.msra.mxu0 0.0
    %583 = vmatprep.subr.mxu0 0.0
    %584 = vmatpush1.msra.mxu0 0.0
    %585 = vmatprep.subr.mxu0 0.0
    %586 = vmatpush1.msra.mxu0 0.0
    %587 = vmatprep.subr.mxu0 0.0
    %588 = vmatpush1.msra.mxu0 0.0
    %589 = vmatprep.mubr.f32.mxu0 0.0
    %590 = vmatmul.mubr.f32.gmra.mrb[0].mxu0 %v523
    %v591 = vpop.f32.mrb[0].mxu0
    %v592 = vadd.f32 0.0, %v591
    %v593 = vpop.f32.mrb[0].mxu0
    %594 = vdwg.mxu0
    %v596 = vrot.slane %v592, 6
    %v598 = vadd.f32 %v114, %v596
    %v599 = vtanh.pop %v598
    %600 = vst.msk [vmem:[#allocation2 + $0x8] sm:$0xc] %vm281, %v599
    %v602 = vrot.slane %v599, 2
    %v603 = vsel %vm31, %v602, 0
    %605 = vmatprep.subr.mxu0 0.0
    %606 = vmatpush1.msra.mxu0 %v120
    %607 = vmatprep.subr.mxu0 0.0
    %608 = vmatpush1.msra.mxu0 %v127
    %609 = vmatprep.subr.mxu0 0.0
    %610 = vmatpush1.msra.mxu0 0.0
    %611 = vmatprep.subr.mxu0 0.0
    %612 = vmatpush1.msra.mxu0 0.0
    %613 = vmatprep.subr.mxu0 0.0
    %614 = vmatpush1.msra.mxu0 0.0
    %615 = vmatprep.subr.mxu0 0.0
    %616 = vmatpush1.msra.mxu0 0.0
    %617 = vmatprep.subr.mxu0 0.0
    %618 = vmatpush1.msra.mxu0 0.0
    %619 = vmatprep.subr.mxu0 0.0
    %620 = vmatpush1.msra.mxu0 0.0
    %621 = vmatprep.subr.mxu0 0.0
    %622 = vmatpush1.msra.mxu0 0.0
    %623 = vmatprep.subr.mxu0 0.0
    %624 = vmatpush1.msra.mxu0 0.0
    %625 = vmatprep.subr.mxu0 0.0
    %626 = vmatpush1.msra.mxu0 0.0
    %627 = vmatprep.subr.mxu0 0.0
    %628 = vmatpush1.msra.mxu0 0.0
    %629 = vmatprep.subr.mxu0 0.0
    %630 = vmatpush1.msra.mxu0 0.0
    %631 = vmatprep.subr.mxu0 0.0
    %632 = vmatpush1.msra.mxu0 0.0
    %633 = vmatprep.subr.mxu0 0.0
    %634 = vmatpush1.msra.mxu0 0.0
    %635 = vmatprep.subr.mxu0 0.0
    %636 = vmatpush1.msra.mxu0 0.0
    %637 = vmatprep.subr.mxu0 0.0
    %638 = vmatpush1.msra.mxu0 0.0
    %639 = vmatprep.subr.mxu0 0.0
    %640 = vmatpush1.msra.mxu0 0.0
    %641 = vmatprep.subr.mxu0 0.0
    %642 = vmatpush1.msra.mxu0 0.0
    %643 = vmatprep.subr.mxu0 0.0
    %644 = vmatpush1.msra.mxu0 0.0
    %645 = vmatprep.subr.mxu0 0.0
    %646 = vmatpush1.msra.mxu0 0.0
    %647 = vmatprep.subr.mxu0 0.0
    %648 = vmatpush1.msra.mxu0 0.0
    %649 = vmatprep.subr.mxu0 0.0
    %650 = vmatpush1.msra.mxu0 0.0
    %651 = vmatprep.subr.mxu0 0.0
    %652 = vmatpush1.msra.mxu0 0.0
    %653 = vmatprep.subr.mxu0 0.0
    %654 = vmatpush1.msra.mxu0 0.0
    %655 = vmatprep.subr.mxu0 0.0
    %656 = vmatpush1.msra.mxu0 0.0
    %657 = vmatprep.subr.mxu0 0.0
    %658 = vmatpush1.msra.mxu0 0.0
    %659 = vmatprep.subr.mxu0 0.0
    %660 = vmatpush1.msra.mxu0 0.0
    %661 = vmatprep.subr.mxu0 0.0
    %662 = vmatpush1.msra.mxu0 0.0
    %663 = vmatprep.subr.mxu0 0.0
    %664 = vmatpush1.msra.mxu0 0.0
    %665 = vmatprep.subr.mxu0 0.0
    %666 = vmatpush1.msra.mxu0 0.0
    %667 = vmatprep.subr.mxu0 0.0
    %668 = vmatpush1.msra.mxu0 0.0
    %669 = vmatprep.mubr.f32.mxu0 0.0
    %670 = vmatmul.mubr.f32.gmra.mrb[0].mxu0 %v603
    %v671 = vpop.f32.mrb[0].mxu0
    %v672 = vadd.f32 0.0, %v671
    %v673 = vpop.f32.mrb[0].mxu0
    %674 = vdwg.mxu0
    %v676 = vrot.slane %v672, 4
    %v678 = vadd.f32 %v114, %v676
    %v679 = vtanh.pop %v678
    %680 = vst.msk [vmem:[#allocation2 + $0x8] sm:$0x30] %vm362, %v679
    %v682 = vrot.slane %v679, 4
    %v683 = vsel %vm31, %v682, 0
    %685 = vmatprep.subr.mxu0 0.0
    %686 = vmatpush1.msra.mxu0 %v120
    %687 = vmatprep.subr.mxu0 0.0
    %688 = vmatpush1.msra.mxu0 %v127
    %689 = vmatprep.subr.mxu0 0.0
    %690 = vmatpush1.msra.mxu0 0.0
    %691 = vmatprep.subr.mxu0 0.0
    %692 = vmatpush1.msra.mxu0 0.0
    %693 = vmatprep.subr.mxu0 0.0
    %694 = vmatpush1.msra.mxu0 0.0
    %695 = vmatprep.subr.mxu0 0.0
    %696 = vmatpush1.msra.mxu0 0.0
    %697 = vmatprep.subr.mxu0 0.0
    %698 = vmatpush1.msra.mxu0 0.0
    %699 = vmatprep.subr.mxu0 0.0
    %700 = vmatpush1.msra.mxu0 0.0
    %701 = vmatprep.subr.mxu0 0.0
    %702 = vmatpush1.msra.mxu0 0.0
    %703 = vmatprep.subr.mxu0 0.0
    %704 = vmatpush1.msra.mxu0 0.0
    %705 = vmatprep.subr.mxu0 0.0
    %706 = vmatpush1.msra.mxu0 0.0
    %707 = vmatprep.subr.mxu0 0.0
    %708 = vmatpush1.msra.mxu0 0.0
    %709 = vmatprep.subr.mxu0 0.0
    %710 = vmatpush1.msra.mxu0 0.0
    %711 = vmatprep.subr.mxu0 0.0
    %712 = vmatpush1.msra.mxu0 0.0
    %713 = vmatprep.subr.mxu0 0.0
    %714 = vmatpush1.msra.mxu0 0.0
    %715 = vmatprep.subr.mxu0 0.0
    %716 = vmatpush1.msra.mxu0 0.0
    %717 = vmatprep.subr.mxu0 0.0
    %718 = vmatpush1.msra.mxu0 0.0
    %719 = vmatprep.subr.mxu0 0.0
    %720 = vmatpush1.msra.mxu0 0.0
    %721 = vmatprep.subr.mxu0 0.0
    %722 = vmatpush1.msra.mxu0 0.0
    %723 = vmatprep.subr.mxu0 0.0
    %724 = vmatpush1.msra.mxu0 0.0
    %725 = vmatprep.subr.mxu0 0.0
    %726 = vmatpush1.msra.mxu0 0.0
    %727 = vmatprep.subr.mxu0 0.0
    %728 = vmatpush1.msra.mxu0 0.0
    %729 = vmatprep.subr.mxu0 0.0
    %730 = vmatpush1.msra.mxu0 0.0
    %731 = vmatprep.subr.mxu0 0.0
    %732 = vmatpush1.msra.mxu0 0.0
    %733 = vmatprep.subr.mxu0 0.0
    %734 = vmatpush1.msra.mxu0 0.0
    %735 = vmatprep.subr.mxu0 0.0
    %736 = vmatpush1.msra.mxu0 0.0
    %737 = vmatprep.subr.mxu0 0.0
    %738 = vmatpush1.msra.mxu0 0.0
    %739 = vmatprep.subr.mxu0 0.0
    %740 = vmatpush1.msra.mxu0 0.0
    %741 = vmatprep.subr.mxu0 0.0
    %742 = vmatpush1.msra.mxu0 0.0
    %743 = vmatprep.subr.mxu0 0.0
    %744 = vmatpush1.msra.mxu0 0.0
    %745 = vmatprep.subr.mxu0 0.0
    %746 = vmatpush1.msra.mxu0 0.0
    %747 = vmatprep.subr.mxu0 0.0
    %748 = vmatpush1.msra.mxu0 0.0
    %749 = vmatprep.mubr.f32.mxu0 0.0
    %750 = vmatmul.mubr.f32.gmra.mrb[0].mxu0 %v683
    %v751 = vpop.f32.mrb[0].mxu0
    %v752 = vadd.f32 0.0, %v751
    %v753 = vpop.f32.mrb[0].mxu0
    %754 = vdwg.mxu0
    %v756 = vrot.slane %v752, 2
    %v758 = vadd.f32 %v114, %v756
    %v759 = vtanh.pop %v758
    %760 = vst.msk [vmem:[#allocation2 + $0x8] sm:$0xc0] %vm443, %v759
    %761 = vst.msk [vmem:[#allocation3 - $0x6] sm:$0xc0] %vm443, %v759
    %v762 = vld [vmem:[#allocation2] sm:$0xff]
    %v763 = vld [vmem:[#allocation2 + $0x8] sm:$0xff]
    %764 = vrot.lane.b32.xlu0 %v20, 108
    %v765 = vpop.permute.xlu0 %764
    %766 = vrot.lane.b32.xlu0 %v21, 108
    %v767 = vpop.permute.xlu0 %766
    %769 = vrot.lane.b32.xlu0 %v29, 118
    %v770 = vpop.permute.xlu0 %769
    %v773 = vsel %vm31, %v762, 0
    %v776 = vsel %vm31, %v763, 0
    %v778 = vsel %vm38, %v767, 0
    %780 = vmatprep.subr.mxu0 0.0
    %781 = vmatpush1.msra.mxu0 %v765
    %782 = vmatprep.subr.mxu0 0.0
    %783 = vmatpush1.msra.mxu0 %v778
    %784 = vmatprep.subr.mxu0 0.0
    %785 = vmatpush1.msra.mxu0 0.0
    %786 = vmatprep.subr.mxu0 0.0
    %787 = vmatpush1.msra.mxu0 0.0
    %788 = vmatprep.subr.mxu0 0.0
    %789 = vmatpush1.msra.mxu0 0.0
    %790 = vmatprep.subr.mxu0 0.0
    %791 = vmatpush1.msra.mxu0 0.0
    %792 = vmatprep.subr.mxu0 0.0
    %793 = vmatpush1.msra.mxu0 0.0
    %794 = vmatprep.subr.mxu0 0.0
    %795 = vmatpush1.msra.mxu0 0.0
    %796 = vmatprep.subr.mxu0 0.0
    %797 = vmatpush1.msra.mxu0 0.0
    %798 = vmatprep.subr.mxu0 0.0
    %799 = vmatpush1.msra.mxu0 0.0
    %800 = vmatprep.subr.mxu0 0.0
    %801 = vmatpush1.msra.mxu0 0.0
    %802 = vmatprep.subr.mxu0 0.0
    %803 = vmatpush1.msra.mxu0 0.0
    %804 = vmatprep.subr.mxu0 0.0
    %805 = vmatpush1.msra.mxu0 0.0
    %806 = vmatprep.subr.mxu0 0.0
    %807 = vmatpush1.msra.mxu0 0.0
    %808 = vmatprep.subr.mxu0 0.0
    %809 = vmatpush1.msra.mxu0 0.0
    %810 = vmatprep.subr.mxu0 0.0
    %811 = vmatpush1.msra.mxu0 0.0
    %812 = vmatprep.subr.mxu0 0.0
    %813 = vmatpush1.msra.mxu0 0.0
    %814 = vmatprep.subr.mxu0 0.0
    %815 = vmatpush1.msra.mxu0 0.0
    %816 = vmatprep.subr.mxu0 0.0
    %817 = vmatpush1.msra.mxu0 0.0
    %818 = vmatprep.subr.mxu0 0.0
    %819 = vmatpush1.msra.mxu0 0.0
    %820 = vmatprep.subr.mxu0 0.0
    %821 = vmatpush1.msra.mxu0 0.0
    %822 = vmatprep.subr.mxu0 0.0
    %823 = vmatpush1.msra.mxu0 0.0
    %824 = vmatprep.subr.mxu0 0.0
    %825 = vmatpush1.msra.mxu0 0.0
    %826 = vmatprep.subr.mxu0 0.0
    %827 = vmatpush1.msra.mxu0 0.0
    %828 = vmatprep.subr.mxu0 0.0
    %829 = vmatpush1.msra.mxu0 0.0
    %830 = vmatprep.subr.mxu0 0.0
    %831 = vmatpush1.msra.mxu0 0.0
    %832 = vmatprep.subr.mxu0 0.0
    %833 = vmatpush1.msra.mxu0 0.0
    %834 = vmatprep.subr.mxu0 0.0
    %835 = vmatpush1.msra.mxu0 0.0
    %836 = vmatprep.subr.mxu0 0.0
    %837 = vmatpush1.msra.mxu0 0.0
    %838 = vmatprep.subr.mxu0 0.0
    %839 = vmatpush1.msra.mxu0 0.0
    %840 = vmatprep.subr.mxu0 0.0
    %841 = vmatpush1.msra.mxu0 0.0
    %842 = vmatprep.subr.mxu0 0.0
    %843 = vmatpush1.msra.mxu0 0.0
    %844 = vmatprep.mubr.f32.mxu0 0.0
    %845 = vmatmul.mubr.f32.gmra.mrb[0].mxu0 %v773
    %v846 = vpop.f32.mrb[0].mxu0
    %v847 = vadd.f32 %v770, %v846
    %v848 = vpop.f32.mrb[0].mxu0
    %849 = vmatprep.mubr.f32.mxu0 0.0
    %850 = vmatmul.mubr.f32.gmra.mrb[0].mxu0 %v776
    %v851 = vpop.f32.mrb[0].mxu0
    %v852 = vadd.f32 %v770, %v851
    %v853 = vpop.f32.mrb[0].mxu0
    %854 = vdwg.mxu0
    %vm855 = vcmask 39936
    %856 = vst.msk [vmem:[%s4] sm:$0xff] %vm855, %v847
    %857 = vst.msk [vmem:[%s4 + $0x8] sm:$0xff] %vm855, %v852
    // Predicated region
    $region18: #{decoder_rnn_forward.1} parent=1 // pred_check
      _
    $region19: #{decoder_rnn_forward.1} parent=1 // pred_check_branch
      %859 = sbr.rel (0) target = $region21
    $region20: #{decoder_rnn_forward.1} parent=1 // pred_region
      _
    $region21: #{decoder_rnn_forward.1} parent=1 // pred_fallthru
      _
    // Predicated region
    $region22: #{decoder_rnn_forward.1} parent=1 // pred_check
      _
    $region23: #{decoder_rnn_forward.1} parent=1 // pred_check_branch
      %861 = sbr.rel (0) target = $region25
    $region24: #{decoder_rnn_forward.1} parent=1 // pred_region
      %s863 = ssub.s32 32, 32
      %864 = vsyncadd [#allocation4], %s863
      %s866 = sshll.u32 [#allocation3], 4
      %s867 = int_to_ptr.vmem [resolvable:$true] %s866
      %869 = dma.vmem_to_hbm [thread:$0]  %s867, 32, %s5, [#allocation4]
    $region25: #{decoder_rnn_forward.1} parent=1 // pred_fallthru
      _
    // Predicated region
    $region26: #{decoder_rnn_forward.1} parent=1 // pred_check
      _
    $region27: #{decoder_rnn_forward.1} parent=1 // pred_check_branch
      %871 = sbr.rel (0) target = $region29
    $region28: #{decoder_rnn_forward.1} parent=1 // pred_region
      _
    $region29: #{decoder_rnn_forward.1} parent=1 // pred_fallthru
      _
    // Predicated region
    $region30: #{decoder_rnn_forward.1} parent=1 // pred_check
      _
    $region31: #{decoder_rnn_forward.1} parent=1 // pred_check_branch
      %873 = sbr.rel (0) target = $region33
    $region32: #{decoder_rnn_forward.1} parent=1 // pred_region
      %874 = dma.done [#allocation4], 32
    $region33: #{decoder_rnn_forward.1} parent=1 // pred_fallthru
      _
    %875 = vsyncpa [#allocation4], 1

</llo_original>
